<compile_context>
chip_gen: v5e
topology: v5e:2x2
jax: 0.10.0
libtpu: 0.0.40
codegen_flags: <defaults>
</compile_context>

<pallas_src>
import jax
import jax.numpy as jnp
from jax.experimental import pallas as pl
from jax.experimental.pallas import tpu as pltpu


# Lane-dense last-dim candidates (all multiples of 128 -> unmasked full-width
# vector stores); prefer the widest one that divides the element count.
_LANE_CANDIDATES = (1024, 512, 256, 128)
# Target VMEM bytes per pipeline buffer.  x2 double-buffering x2 (in + out)
# = 16 MiB peak at f32, well under the explicit 32 MiB scoped-VMEM limit on
# every TPU generation (v5e/v6e: 128 MiB physical, v7x: 64 MiB physical).
_TARGET_TILE_BYTES = 4 * 1024 * 1024
_VMEM_LIMIT_BYTES = 32 * 1024 * 1024
_SUPPORTED_ITEMSIZES = (1, 2, 4)
_UNSUPPORTED_DTYPE_NAMES = ("int4", "uint4", "bool")


def _identity_copy_kernel(x_ref, o_ref):
    # Pure pass-through of the current VMEM tile (vld/vst only; HBM-bound).
    o_ref[...] = x_ref[...]


def identity(x: jax.Array, *, use_pallas: bool = True) -> jax.Array:
    """Pallas implementation of Identity.forward: returns x unchanged."""
    if not use_pallas:
        # Optimal path: Identity is a no-op -> zero HBM traffic, zero launch cost.
        return x

    dt = jnp.dtype(x.dtype)
    total = x.size

    # Guards: nothing to copy, or dtypes that don't tile cleanly -> no-op
    # return (still exactly Identity semantics, and strictly cheaper than any copy).
    if (total == 0
            or dt.name in _UNSUPPORTED_DTYPE_NAMES
            or dt.itemsize not in _SUPPORTED_ITEMSIZES):
        return x

    # Lane-dense 2-D slab: widest last dim (multiple of 128) dividing `total`.
    lane_w = next((l for l in _LANE_CANDIDATES if total % l == 0), None)
    if lane_w is None:
        # Ragged size: skip the copy rather than pad + copy + slice (which
        # would roughly triple HBM traffic).  Identity stays exact.
        return x

    rows = total // lane_w
    x2 = x.reshape(rows, lane_w)  # free (layout-level) reshape, no extra HBM pass

    # Rows per block: ~_TARGET_TILE_BYTES per buffer, a multiple of 8
    # (sublane), clamped to the full row count (a full-extent block is always
    # legal even when rows < 8).
    bytes_per_row = lane_w * dt.itemsize
    block_rows = (_TARGET_TILE_BYTES // bytes_per_row) // 8 * 8
    block_rows = min(rows, max(8, block_rows))
    grid = (pl.cdiv(rows, block_rows),)

    out2 = pl.pallas_call(
        _identity_copy_kernel,
        out_shape=jax.ShapeDtypeStruct((rows, lane_w), dt),
        grid=grid,
        in_specs=[pl.BlockSpec((block_rows, lane_w), lambda i: (i, 0))],
        out_specs=pl.BlockSpec((block_rows, lane_w), lambda i: (i, 0)),
        # Output buffer IS the input buffer: no second HBM allocation; fully
        # in-place when the caller donates x.
        input_output_aliases={0: 0},
        compiler_params=pltpu.CompilerParams(
            dimension_semantics=("parallel",),
            vmem_limit_bytes=_VMEM_LIMIT_BYTES,
        ),
    )(x2)

    return out2.reshape(x.shape)


if __name__ == "__main__":
    key = jax.random.PRNGKey(0)
    # Small NCHW-style input, consistent with the reference module.
    x = jax.random.normal(key, (2, 4, 16, 16), dtype=jnp.float32)

    y = jax.jit(identity)(x)
    jax.block_until_ready(y)

    assert y.shape == x.shape and y.dtype == x.dtype
    assert bool(jnp.all(y == x))
    print("KERNEL_OK")
</pallas_src>

<mosaic_0001>
module attributes {stable_mosaic.version = 11 : i64} {
  func.func @_identity_copy_kernel(%arg0: i32, %arg1: memref<2x1024xf32, #tpu.memory_space<vmem>>, %arg2: memref<2x1024xf32, #tpu.memory_space<vmem>>) attributes {dimension_semantics = [#tpu.dimension_semantics<parallel>], iteration_bounds = array<i64: 1>, scalar_prefetch = 0 : i64, scratch_operands = 0 : i64, tpu.core_type = #tpu.core_type<tc>, window_params = [{transform_indices = @transform_0, window_bounds = array<i64: 2, 1024>}, {transform_indices = @transform_1, window_bounds = array<i64: 2, 1024>}]} {
    %c0 = arith.constant 0 : index
    %c0_0 = arith.constant 0 : index
    %0 = vector.load %arg1[%c0, %c0_0] : memref<2x1024xf32, #tpu.memory_space<vmem>>, vector<2x1024xf32>
    %c0_1 = arith.constant 0 : index
    %c0_2 = arith.constant 0 : index
    %1 = vector.load %arg2[%c0_1, %c0_2] : memref<2x1024xf32, #tpu.memory_space<vmem>>, vector<2x1024xf32>
    tpu.vector_store %arg2[%c0_1, %c0_2], %0 {strides = array<i32>} : memref<2x1024xf32, #tpu.memory_space<vmem>>, vector<2x1024xf32>,
    return
  }
  func.func @transform_0(%arg0: i32) -> (i32, i32) {
    %c0_i32 = arith.constant 0 : i32
    %c0_i32_0 = arith.constant 0 : i32
    return %arg0, %c0_i32 : i32, i32
  }
  func.func @transform_1(%arg0: i32) -> (i32, i32) {
    %c0_i32 = arith.constant 0 : i32
    %c0_i32_0 = arith.constant 0 : i32
    return %arg0, %c0_i32 : i32, i32
  }
}

</mosaic_0001>

<llo_original>
// kernel: identity.1
$region0: #{identity.1}
  #allocation0 [shape = 'u32[]', space=smem, size = 0x4, offset = 0x4, fixed_abs, tag = 'smem constant byte address 0x4 - core index']
  #allocation1 [shape = 'u32[72,128]{1,0:T(1,128)}', space=vmem, size = 0x9000, scoped, tag = 'internal scratch']
  %s0 = inlined_call_operand.vmem [shape: f32[2,1024], index: 0, kind: input, shape index: {}, may-alias: {0,1}]
  %s1 = inlined_call_operand.vmem [shape: f32[2,1024], index: 1, kind: output, shape index: {}, may-alias: {0,1}]
  %s2 = sld [smem:[#allocation0]]
  $region14: #{identity.1} parent=0
    _
  %s4 = ssub.s32 1, %s2
  %s5 = scalar_select 0, %s4, %s2
  // Predicated region
  $region2: #{identity.1} parent=0 // pred_check
    _
  $region3: #{identity.1} parent=0 // pred_check_branch
    %7 = sbr.rel (0) target = $region5
  $region4: #{identity.1} parent=0 // pred_region
    _
  $region5: #{identity.1} parent=0 // pred_fallthru
    _
  %v8 = vld [vmem:[%s0] sm:$0xff]
  %v9 = vld [vmem:[%s0 + $0x8] sm:$0xff]
  %10 = vst [vmem:[%s1] sm:$0xff] %v8
  %11 = vst [vmem:[%s1 + $0x8] sm:$0xff] %v9
  // Predicated region
  $region6: #{identity.1} parent=0 // pred_check
    _
  $region7: #{identity.1} parent=0 // pred_check_branch
    %13 = sbr.rel (0) target = $region9
  $region8: #{identity.1} parent=0 // pred_region
    _
  $region9: #{identity.1} parent=0 // pred_fallthru
    _
  // Predicated region
  $region10: #{identity.1} parent=0 // pred_check
    _
  $region11: #{identity.1} parent=0 // pred_check_branch
    %15 = sbr.rel (0) target = $region13
  $region12: #{identity.1} parent=0 // pred_region
    _
  $region13: #{identity.1} parent=0 // pred_fallthru
    _

</llo_original>
